<compile_context>
chip_gen: v7x
topology: tpu7x:2x2x1
jax: 0.10.0
libtpu: 0.0.40
codegen_flags: <defaults>
</compile_context>

<pallas_src>
import functools

import jax
import jax.numpy as jnp
from jax import lax
from jax.experimental import pallas as pl
from jax.experimental.pallas import tpu as pltpu

EPS = 1e-6


def pcen_kernel(x_ref, p_ref, o_ref, carry_ref, *, inv_eps, r_is_one, clamp):
    # x_ref / o_ref : (F, T_TILE)  -- bands on sublanes, time on lanes
    # p_ref         : (F, 8) packed per-band params:
    #                 [1-s, s, -alpha, delta, r, eps^(-alpha), delta^r, pad]
    # carry_ref     : (F, 1) VMEM scratch, smoother value carried across T tiles
    F, Tt = x_ref.shape

    one_minus_s = p_ref[:, 0:1]
    s = p_ref[:, 1:2]
    neg_alpha = p_ref[:, 2:3]
    delta = p_ref[:, 3:4]
    r = p_ref[:, 4:5]
    eps_pow_neg_alpha = p_ref[:, 5:6]
    delta_pow_r = p_ref[:, 6:7]

    x = x_ref[...]
    if clamp is not None:
        x = jnp.maximum(x, jnp.float32(clamp))

    # First time-tile of each batch element: seed the carry with X_0 so that the
    # uniform recurrence yields M_0 = (1-s)*X_0 + s*X_0 = X_0 (matches reference).
    @pl.when(pl.program_id(1) == 0)
    def _():
        carry_ref[...] = x[:, 0:1]

    # ---- log-depth parallel scan of the affine recurrence M_t = a*M_{t-1} + b_t
    # Represent each step as f_t(m) = a_t*m + b_t with a_t = 1-s, b_t = s*x_t.
    # Hillis-Steele composes prefixes:  A_t <- A_t*A_{t-k},  B_t <- A_t*B_{t-k}+B_t.
    a = jnp.broadcast_to(one_minus_s, (F, Tt))   # hoisted broadcast (once)
    b = s * x

    lane = lax.broadcasted_iota(jnp.int32, (F, Tt), 1)
    shift = 1
    while shift < Tt:                            # trace-time unrolled: log2(T_TILE) steps
        mask = lane >= shift                     # wrapped lanes -> identity element
        a_sh = jnp.where(mask, pltpu.roll(a, shift, 1), 1.0)
        b_sh = jnp.where(mask, pltpu.roll(b, shift, 1), 0.0)
        b = a * b_sh + b                         # use old `a` before updating it
        a = a * a_sh
        shift *= 2

    m = a * carry_ref[...] + b                   # apply carried state from previous tile
    carry_ref[...] = m[:, Tt - 1:Tt]             # carry last smoother value forward

    # ---- elementwise PCEN on the full (F, T_TILE) tile
    # (eps + M)^(-alpha) == eps^(-alpha) * exp(-alpha * log1p(M / eps))
    smoother = eps_pow_neg_alpha * jnp.exp(neg_alpha * jnp.log1p(m * inv_eps))
    base = x * smoother + delta
    if r_is_one:
        o_ref[...] = base - delta                # skip per-element pow when r == 1
    else:
        o_ref[...] = base ** r - delta_pow_r


def pcen_forward(x, s, alpha, delta, r_param, *, eps=EPS, learn_logs=False,
                 clamp=None, r_is_one=False, t_tile=None):
    """x: (B, num_bands, time) in natural PyTorch layout. Returns the same shape."""
    B, F, T = x.shape
    x = x.astype(jnp.float32)

    # Parameter preparation (matches the torch forward exactly).
    if learn_logs:
        s_e, alpha_e = jnp.exp(s), jnp.exp(alpha)
        delta_e, r_e = jnp.exp(delta), jnp.exp(r_param)
    else:
        s_e = s
        alpha_e = jnp.minimum(alpha, 1.0)        # alpha.clamp(max=1)
        delta_e = jnp.maximum(delta, 0.0)        # delta.clamp(min=0)
        r_e = 1.0 / jnp.maximum(r_param, 1.0)    # 1 / r.clamp(min=1)

    eps_f = jnp.float32(eps)
    params = jnp.stack([
        1.0 - s_e,                               # 0: 1 - s
        s_e,                                     # 1: s
        -alpha_e,                                # 2: -alpha
        delta_e,                                 # 3: delta
        r_e,                                     # 4: r
        jnp.exp(-alpha_e * jnp.log(eps_f)),      # 5: eps^(-alpha)  (precomputed)
        delta_e ** r_e,                          # 6: delta^r       (precomputed)
        jnp.zeros_like(s_e),                     # 7: pad
    ], axis=1).astype(jnp.float32)               # (F, 8)

    # Time tiling: lanes stay 128-dense; pad T up to a multiple of the tile.
    if t_tile is None:
        t_tile = min(512, ((T + 127) // 128) * 128)
    assert t_tile % 128 == 0
    T_pad = ((T + t_tile - 1) // t_tile) * t_tile
    if T_pad != T:
        x = jnp.pad(x, ((0, 0), (0, 0), (0, T_pad - T)))

    kernel = functools.partial(pcen_kernel, inv_eps=float(1.0 / eps),
                               r_is_one=bool(r_is_one), clamp=clamp)

    out = pl.pallas_call(
        kernel,
        out_shape=jax.ShapeDtypeStruct((B, F, T_pad), jnp.float32),
        grid_spec=pltpu.PrefetchScalarGridSpec(
            num_scalar_prefetch=0,
            grid=(B, T_pad // t_tile),
            in_specs=[
                pl.BlockSpec((None, F, t_tile), lambda b, j: (b, 0, j)),  # x
                pl.BlockSpec((F, 8), lambda b, j: (0, 0)),                # packed params
            ],
            out_specs=pl.BlockSpec((None, F, t_tile), lambda b, j: (b, 0, j)),
            scratch_shapes=[pltpu.VMEM((F, 1), jnp.float32)],             # M carry
        ),
        compiler_params=pltpu.CompilerParams(
            dimension_semantics=("parallel", "arbitrary")),
    )(x, params)

    if T_pad != T:
        out = out[:, :, :T]
    return out


def pcen_reference(x, s, alpha, delta, r_param, eps=EPS):
    """Pure-JAX reference of the PyTorch forward (learn_logs=False, clamp=None)."""
    alpha_e = jnp.minimum(alpha, 1.0)[:, None]
    delta_e = jnp.maximum(delta, 0.0)[:, None]
    r_e = (1.0 / jnp.maximum(r_param, 1.0))[:, None]

    x_tm = jnp.moveaxis(x, -1, 0)                # (T, B, F)

    def scan_fn(m_prev, x_t):
        m_t = (1.0 - s) * m_prev + s * x_t
        return m_t, m_t

    _, ms = lax.scan(scan_fn, x_tm[0], x_tm[1:])
    m = jnp.concatenate([x_tm[:1], ms], axis=0)
    m = jnp.moveaxis(m, 0, -1)                   # (B, F, T)
    smoother = jnp.exp(-alpha_e * (jnp.log(jnp.float32(eps)) + jnp.log1p(m / eps)))
    return (x * smoother + delta_e) ** r_e - delta_e ** r_e


if __name__ == "__main__":
    B, F, T = 2, 16, 384                         # batch, num_bands, time (3 time tiles)

    key = jax.random.PRNGKey(0)
    k1, k2, k3, k4, k5 = jax.random.split(key, 5)
    # PCEN is applied to non-negative energies; use |N(0,1)| as a stand-in.
    x = jnp.abs(jax.random.normal(k1, (B, F, T), dtype=jnp.float32))

    # Non-trivial per-band parameters (exercise the clamps and the general pow path).
    s_p = 0.015 + 0.02 * jax.random.uniform(k2, (F,), dtype=jnp.float32)
    alpha_p = 0.7 + 0.6 * jax.random.uniform(k3, (F,), dtype=jnp.float32)
    delta_p = 0.5 + jax.random.uniform(k4, (F,), dtype=jnp.float32)
    r_p = 1.0 + jax.random.uniform(k5, (F,), dtype=jnp.float32)

    y = jax.block_until_ready(pcen_forward(x, s_p, alpha_p, delta_p, r_p, t_tile=128))
    y_ref = pcen_reference(x, s_p, alpha_p, delta_p, r_p)
    assert y.shape == (B, F, T)
    assert jnp.allclose(y, y_ref, rtol=1e-3, atol=1e-3), (
        f"max abs err {jnp.max(jnp.abs(y - y_ref))}")

    # Default PCEN init (s=0.025, alpha=delta=r=1) through the static r==1 fast path.
    s0 = jnp.full((F,), 0.025, jnp.float32)
    a0 = jnp.full((F,), 1.0, jnp.float32)
    d0 = jnp.full((F,), 1.0, jnp.float32)
    r0 = jnp.full((F,), 1.0, jnp.float32)
    y2 = jax.block_until_ready(pcen_forward(x, s0, a0, d0, r0, r_is_one=True))
    y2_ref = pcen_reference(x, s0, a0, d0, r0)
    assert jnp.allclose(y2, y2_ref, rtol=1e-3, atol=1e-3), (
        f"max abs err {jnp.max(jnp.abs(y2 - y2_ref))}")

    print("KERNEL_OK")
</pallas_src>

<mosaic_0001>
module attributes {stable_mosaic.version = 11 : i64} {
  func.func @pcen_kernel(%arg0: i32, %arg1: i32, %arg2: memref<1x16x128xf32, #tpu.memory_space<vmem>>, %arg3: memref<16x8xf32, #tpu.memory_space<vmem>>, %arg4: memref<1x16x128xf32, #tpu.memory_space<vmem>>, %arg5: memref<16x1xf32, #tpu.memory_space<vmem>>) attributes {dimension_semantics = [#tpu.dimension_semantics<parallel>, #tpu.dimension_semantics<arbitrary>], iteration_bounds = array<i64: 2, 3>, scalar_prefetch = 0 : i64, scratch_operands = 1 : i64, tpu.core_type = #tpu.core_type<tc>, window_params = [{transform_indices = @transform_0, window_bounds = array<i64: 1, 16, 128>}, {pipeline_mode = #tpu.pipeline_mode<synchronous>, transform_indices = @transform_1, window_bounds = array<i64: 16, 8>}, {transform_indices = @transform_2, window_bounds = array<i64: 1, 16, 128>}]} {
    %c0 = arith.constant 0 : index
    %c0_0 = arith.constant 0 : index
    %0 = vector.load %arg3[%c0, %c0_0] : memref<16x8xf32, #tpu.memory_space<vmem>>, vector<16x1xf32>
    %c0_1 = arith.constant 0 : index
    %c1 = arith.constant 1 : index
    %1 = vector.load %arg3[%c0_1, %c1] : memref<16x8xf32, #tpu.memory_space<vmem>>, vector<16x1xf32>
    %c0_2 = arith.constant 0 : index
    %c2 = arith.constant 2 : index
    %2 = vector.load %arg3[%c0_2, %c2] : memref<16x8xf32, #tpu.memory_space<vmem>>, vector<16x1xf32>
    %c0_3 = arith.constant 0 : index
    %c3 = arith.constant 3 : index
    %3 = vector.load %arg3[%c0_3, %c3] : memref<16x8xf32, #tpu.memory_space<vmem>>, vector<16x1xf32>
    %c0_4 = arith.constant 0 : index
    %c4 = arith.constant 4 : index
    %4 = vector.load %arg3[%c0_4, %c4] : memref<16x8xf32, #tpu.memory_space<vmem>>, vector<16x1xf32>
    %c0_5 = arith.constant 0 : index
    %c5 = arith.constant 5 : index
    %5 = vector.load %arg3[%c0_5, %c5] : memref<16x8xf32, #tpu.memory_space<vmem>>, vector<16x1xf32>
    %c0_6 = arith.constant 0 : index
    %c6 = arith.constant 6 : index
    %6 = vector.load %arg3[%c0_6, %c6] : memref<16x8xf32, #tpu.memory_space<vmem>>, vector<16x1xf32>
    %c0_7 = arith.constant 0 : index
    %c0_8 = arith.constant 0 : index
    %c0_9 = arith.constant 0 : index
    %7 = vector.load %arg2[%c0_7, %c0_8, %c0_9] : memref<1x16x128xf32, #tpu.memory_space<vmem>>, vector<1x16x128xf32>
    %8 = vector.shape_cast %7 : vector<1x16x128xf32> to vector<16x128xf32>
    %c0_i32 = arith.constant 0 : i32
    %9 = arith.cmpi eq, %arg1, %c0_i32 : i32
    %10 = arith.extui %9 : i1 to i32
    %c0_i32_10 = arith.constant 0 : i32
    %11 = arith.cmpi ne, %10, %c0_i32_10 : i32
    scf.if %11 {
      %118 = vector.extract_strided_slice %8 {offsets = [0, 0], sizes = [16, 1], strides = [1, 1]} : vector<16x128xf32> to vector<16x1xf32>
      %c0_46 = arith.constant 0 : index
      %c0_47 = arith.constant 0 : index
      %119 = vector.load %arg5[%c0_46, %c0_47] : memref<16x1xf32, #tpu.memory_space<vmem>>, vector<16x1xf32>
      tpu.vector_store %arg5[%c0_46, %c0_47], %118 {strides = array<i32>} : memref<16x1xf32, #tpu.memory_space<vmem>>, vector<16x1xf32>,
    } else {
    }
    %12 = vector.shape_cast %0 : vector<16x1xf32> to vector<16x1xf32>
    %13 = vector.broadcast %12 : vector<16x1xf32> to vector<16x128xf32>
    %14 = vector.broadcast %1 : vector<16x1xf32> to vector<16x128xf32>
    %15 = arith.mulf %14, %8 : vector<16x128xf32>
    %16 = tpu.iota {dimensions = array<i32: 1>} : vector<16x128xi32>
    %c1_i32 = arith.constant 1 : i32
    %17 = vector.broadcast %c1_i32 : i32 to vector<16x128xi32>
    %18 = arith.cmpi sge, %16, %17 : vector<16x128xi32>
    %c1_i32_11 = arith.constant 1 : i32
    %19 = tpu.dynamic_rotate %13 by %c1_i32_11 dim 1 : vector<16x128xf32>, i32 -> vector<16x128xf32>
    %cst = arith.constant 1.000000e+00 : f32
    %20 = vector.broadcast %cst : f32 to vector<16x128xf32>
    %21 = arith.select %18, %19, %20 : vector<16x128xi1>, vector<16x128xf32>
    %c1_i32_12 = arith.constant 1 : i32
    %22 = tpu.dynamic_rotate %15 by %c1_i32_12 dim 1 : vector<16x128xf32>, i32 -> vector<16x128xf32>
    %cst_13 = arith.constant 0.000000e+00 : f32
    %23 = vector.broadcast %cst_13 : f32 to vector<16x128xf32>
    %24 = arith.select %18, %22, %23 : vector<16x128xi1>, vector<16x128xf32>
    %25 = arith.mulf %13, %24 : vector<16x128xf32>
    %26 = arith.addf %25, %15 : vector<16x128xf32>
    %27 = arith.mulf %13, %21 : vector<16x128xf32>
    %c2_i32 = arith.constant 2 : i32
    %28 = vector.broadcast %c2_i32 : i32 to vector<16x128xi32>
    %29 = arith.cmpi sge, %16, %28 : vector<16x128xi32>
    %c2_i32_14 = arith.constant 2 : i32
    %30 = tpu.dynamic_rotate %27 by %c2_i32_14 dim 1 : vector<16x128xf32>, i32 -> vector<16x128xf32>
    %cst_15 = arith.constant 1.000000e+00 : f32
    %31 = vector.broadcast %cst_15 : f32 to vector<16x128xf32>
    %32 = arith.select %29, %30, %31 : vector<16x128xi1>, vector<16x128xf32>
    %c2_i32_16 = arith.constant 2 : i32
    %33 = tpu.dynamic_rotate %26 by %c2_i32_16 dim 1 : vector<16x128xf32>, i32 -> vector<16x128xf32>
    %cst_17 = arith.constant 0.000000e+00 : f32
    %34 = vector.broadcast %cst_17 : f32 to vector<16x128xf32>
    %35 = arith.select %29, %33, %34 : vector<16x128xi1>, vector<16x128xf32>
    %36 = arith.mulf %27, %35 : vector<16x128xf32>
    %37 = arith.addf %36, %26 : vector<16x128xf32>
    %38 = arith.mulf %27, %32 : vector<16x128xf32>
    %c4_i32 = arith.constant 4 : i32
    %39 = vector.broadcast %c4_i32 : i32 to vector<16x128xi32>
    %40 = arith.cmpi sge, %16, %39 : vector<16x128xi32>
    %c4_i32_18 = arith.constant 4 : i32
    %41 = tpu.dynamic_rotate %38 by %c4_i32_18 dim 1 : vector<16x128xf32>, i32 -> vector<16x128xf32>
    %cst_19 = arith.constant 1.000000e+00 : f32
    %42 = vector.broadcast %cst_19 : f32 to vector<16x128xf32>
    %43 = arith.select %40, %41, %42 : vector<16x128xi1>, vector<16x128xf32>
    %c4_i32_20 = arith.constant 4 : i32
    %44 = tpu.dynamic_rotate %37 by %c4_i32_20 dim 1 : vector<16x128xf32>, i32 -> vector<16x128xf32>
    %cst_21 = arith.constant 0.000000e+00 : f32
    %45 = vector.broadcast %cst_21 : f32 to vector<16x128xf32>
    %46 = arith.select %40, %44, %45 : vector<16x128xi1>, vector<16x128xf32>
    %47 = arith.mulf %38, %46 : vector<16x128xf32>
    %48 = arith.addf %47, %37 : vector<16x128xf32>
    %49 = arith.mulf %38, %43 : vector<16x128xf32>
    %c8_i32 = arith.constant 8 : i32
    %50 = vector.broadcast %c8_i32 : i32 to vector<16x128xi32>
    %51 = arith.cmpi sge, %16, %50 : vector<16x128xi32>
    %c8_i32_22 = arith.constant 8 : i32
    %52 = tpu.dynamic_rotate %49 by %c8_i32_22 dim 1 : vector<16x128xf32>, i32 -> vector<16x128xf32>
    %cst_23 = arith.constant 1.000000e+00 : f32
    %53 = vector.broadcast %cst_23 : f32 to vector<16x128xf32>
    %54 = arith.select %51, %52, %53 : vector<16x128xi1>, vector<16x128xf32>
    %c8_i32_24 = arith.constant 8 : i32
    %55 = tpu.dynamic_rotate %48 by %c8_i32_24 dim 1 : vector<16x128xf32>, i32 -> vector<16x128xf32>
    %cst_25 = arith.constant 0.000000e+00 : f32
    %56 = vector.broadcast %cst_25 : f32 to vector<16x128xf32>
    %57 = arith.select %51, %55, %56 : vector<16x128xi1>, vector<16x128xf32>
    %58 = arith.mulf %49, %57 : vector<16x128xf32>
    %59 = arith.addf %58, %48 : vector<16x128xf32>
    %60 = arith.mulf %49, %54 : vector<16x128xf32>
    %c16_i32 = arith.constant 16 : i32
    %61 = vector.broadcast %c16_i32 : i32 to vector<16x128xi32>
    %62 = arith.cmpi sge, %16, %61 : vector<16x128xi32>
    %c16_i32_26 = arith.constant 16 : i32
    %63 = tpu.dynamic_rotate %60 by %c16_i32_26 dim 1 : vector<16x128xf32>, i32 -> vector<16x128xf32>
    %cst_27 = arith.constant 1.000000e+00 : f32
    %64 = vector.broadcast %cst_27 : f32 to vector<16x128xf32>
    %65 = arith.select %62, %63, %64 : vector<16x128xi1>, vector<16x128xf32>
    %c16_i32_28 = arith.constant 16 : i32
    %66 = tpu.dynamic_rotate %59 by %c16_i32_28 dim 1 : vector<16x128xf32>, i32 -> vector<16x128xf32>
    %cst_29 = arith.constant 0.000000e+00 : f32
    %67 = vector.broadcast %cst_29 : f32 to vector<16x128xf32>
    %68 = arith.select %62, %66, %67 : vector<16x128xi1>, vector<16x128xf32>
    %69 = arith.mulf %60, %68 : vector<16x128xf32>
    %70 = arith.addf %69, %59 : vector<16x128xf32>
    %71 = arith.mulf %60, %65 : vector<16x128xf32>
    %c32_i32 = arith.constant 32 : i32
    %72 = vector.broadcast %c32_i32 : i32 to vector<16x128xi32>
    %73 = arith.cmpi sge, %16, %72 : vector<16x128xi32>
    %c32_i32_30 = arith.constant 32 : i32
    %74 = tpu.dynamic_rotate %71 by %c32_i32_30 dim 1 : vector<16x128xf32>, i32 -> vector<16x128xf32>
    %cst_31 = arith.constant 1.000000e+00 : f32
    %75 = vector.broadcast %cst_31 : f32 to vector<16x128xf32>
    %76 = arith.select %73, %74, %75 : vector<16x128xi1>, vector<16x128xf32>
    %c32_i32_32 = arith.constant 32 : i32
    %77 = tpu.dynamic_rotate %70 by %c32_i32_32 dim 1 : vector<16x128xf32>, i32 -> vector<16x128xf32>
    %cst_33 = arith.constant 0.000000e+00 : f32
    %78 = vector.broadcast %cst_33 : f32 to vector<16x128xf32>
    %79 = arith.select %73, %77, %78 : vector<16x128xi1>, vector<16x128xf32>
    %80 = arith.mulf %71, %79 : vector<16x128xf32>
    %81 = arith.addf %80, %70 : vector<16x128xf32>
    %82 = arith.mulf %71, %76 : vector<16x128xf32>
    %c64_i32 = arith.constant 64 : i32
    %83 = vector.broadcast %c64_i32 : i32 to vector<16x128xi32>
    %84 = arith.cmpi sge, %16, %83 : vector<16x128xi32>
    %c64_i32_34 = arith.constant 64 : i32
    %85 = tpu.dynamic_rotate %82 by %c64_i32_34 dim 1 : vector<16x128xf32>, i32 -> vector<16x128xf32>
    %cst_35 = arith.constant 1.000000e+00 : f32
    %86 = vector.broadcast %cst_35 : f32 to vector<16x128xf32>
    %87 = arith.select %84, %85, %86 : vector<16x128xi1>, vector<16x128xf32>
    %c64_i32_36 = arith.constant 64 : i32
    %88 = tpu.dynamic_rotate %81 by %c64_i32_36 dim 1 : vector<16x128xf32>, i32 -> vector<16x128xf32>
    %cst_37 = arith.constant 0.000000e+00 : f32
    %89 = vector.broadcast %cst_37 : f32 to vector<16x128xf32>
    %90 = arith.select %84, %88, %89 : vector<16x128xi1>, vector<16x128xf32>
    %91 = arith.mulf %82, %90 : vector<16x128xf32>
    %92 = arith.addf %91, %81 : vector<16x128xf32>
    %93 = arith.mulf %82, %87 : vector<16x128xf32>
    %c0_38 = arith.constant 0 : index
    %c0_39 = arith.constant 0 : index
    %94 = vector.load %arg5[%c0_38, %c0_39] : memref<16x1xf32, #tpu.memory_space<vmem>>, vector<16x1xf32>
    %95 = vector.broadcast %94 : vector<16x1xf32> to vector<16x128xf32>
    %96 = arith.mulf %93, %95 : vector<16x128xf32>
    %97 = arith.addf %96, %92 : vector<16x128xf32>
    %98 = vector.extract_strided_slice %97 {offsets = [0, 127], sizes = [16, 1], strides = [1, 1]} : vector<16x128xf32> to vector<16x1xf32>
    %c0_40 = arith.constant 0 : index
    %c0_41 = arith.constant 0 : index
    %99 = vector.load %arg5[%c0_40, %c0_41] : memref<16x1xf32, #tpu.memory_space<vmem>>, vector<16x1xf32>
    tpu.vector_store %arg5[%c0_40, %c0_41], %98 {strides = array<i32>} : memref<16x1xf32, #tpu.memory_space<vmem>>, vector<16x1xf32>,
    %cst_42 = arith.constant 1.000000e+06 : f32
    %100 = vector.broadcast %cst_42 : f32 to vector<16x128xf32>
    %101 = arith.mulf %97, %100 : vector<16x128xf32>
    %102 = math.log1p %101 : vector<16x128xf32>
    %103 = vector.broadcast %2 : vector<16x1xf32> to vector<16x128xf32>
    %104 = arith.mulf %103, %102 : vector<16x128xf32>
    %105 = math.exp %104 : vector<16x128xf32>
    %106 = vector.broadcast %5 : vector<16x1xf32> to vector<16x128xf32>
    %107 = arith.mulf %106, %105 : vector<16x128xf32>
    %108 = arith.mulf %8, %107 : vector<16x128xf32>
    %109 = vector.broadcast %3 : vector<16x1xf32> to vector<16x128xf32>
    %110 = arith.addf %108, %109 : vector<16x128xf32>
    %111 = vector.broadcast %4 : vector<16x1xf32> to vector<16x128xf32>
    %112 = math.powf %110, %111 : vector<16x128xf32>
    %113 = vector.broadcast %6 : vector<16x1xf32> to vector<16x128xf32>
    %114 = arith.subf %112, %113 : vector<16x128xf32>
    %c0_43 = arith.constant 0 : index
    %c0_44 = arith.constant 0 : index
    %c0_45 = arith.constant 0 : index
    %115 = vector.load %arg4[%c0_43, %c0_44, %c0_45] : memref<1x16x128xf32, #tpu.memory_space<vmem>>, vector<1x16x128xf32>
    %116 = vector.shape_cast %115 : vector<1x16x128xf32> to vector<16x128xf32>
    %117 = vector.shape_cast %114 : vector<16x128xf32> to vector<1x16x128xf32>
    tpu.vector_store %arg4[%c0_43, %c0_44, %c0_45], %117 {strides = array<i32>} : memref<1x16x128xf32, #tpu.memory_space<vmem>>, vector<1x16x128xf32>,
    return
  }
  func.func @transform_0(%arg0: i32, %arg1: i32) -> (i32, i32, i32) {
    %c0_i32 = arith.constant 0 : i32
    %c0_i32_0 = arith.constant 0 : i32
    return %arg0, %c0_i32, %arg1 : i32, i32, i32
  }
  func.func @transform_1(%arg0: i32, %arg1: i32) -> (i32, i32) {
    %c0_i32 = arith.constant 0 : i32
    %c0_i32_0 = arith.constant 0 : i32
    %c0_i32_1 = arith.constant 0 : i32
    return %c0_i32, %c0_i32_0 : i32, i32
  }
  func.func @transform_2(%arg0: i32, %arg1: i32) -> (i32, i32, i32) {
    %c0_i32 = arith.constant 0 : i32
    %c0_i32_0 = arith.constant 0 : i32
    return %arg0, %c0_i32, %arg1 : i32, i32, i32
  }
}

</mosaic_0001>

<llo_original>
// kernel: tpu_custom_call.1
$region0: #{tpu_custom_call.1}
  #allocation0 [shape = 'u32[]', space=smem, size = 0x4, offset = 0x4, fixed_abs, tag = 'smem constant byte address 0x4 - core index']
  #allocation1 [shape = 'u32[144,128]{1,0:T(1,128)}', space=vmem, size = 0x12000, scoped, tag = 'internal scratch']
  #allocation2 [shape = 'f32[16,1]{1,0:T(8,128)}', space=vmem, size = 0x2000, scoped, tag = 'scratch operand']
  %s0 = inlined_call_operand.hbm [shape: f32[2,16,384], index: 0, kind: input, shape index: {}]
  %s1 = inlined_call_operand.vmem [shape: f32[16,8], index: 1, kind: input, shape index: {}]
  %s2 = inlined_call_operand.hbm [shape: f32[2,16,384], index: 2, kind: output, shape index: {}]
  %s3 = sld [smem:[#allocation0]]
  $region49: #{tpu_custom_call.1} parent=0
    _
  %s5 = ssub.s32 1, %s3
  %s6 = scalar_select 0, %s5, %s3
  $region1: #{tpu_custom_call.1} parent=0
    #allocation3 [shape = 'u8[16384]{0}', space=vmem, size = 0x4000, scoped, tag = 'input window, operand 0']
    #allocation4 [shape = 's32[2]{0}', space=sflag, size = 0x8, scoped, tag = 'scoped memory for tpu_custom_call.1']
    #allocation5 [shape = 's32[2]{0}', space=sflag, size = 0x8, scoped, tag = 'scoped memory for tpu_custom_call.1']
    #allocation6 [shape = 'u8[16384]{0}', space=vmem, size = 0x4000, scoped, tag = 'output window, operand 0']
    %7 = vsyncpa [#allocation4], 0
    %s8 = scalar_lea.sflag [#allocation4], 1
    %9 = vsyncpa %s8, 0
    %10 = vsyncpa [#allocation5], 0
    %s11 = scalar_lea.sflag [#allocation5], 1
    %12 = vsyncpa %s11, 0
    loop: start=0, step=1, limit=8
    $region2: #{tpu_custom_call.1} parent=1 // loop_pre_header
      _
    $region3: #{tpu_custom_call.1} parent=1 // loop_header
      %s14 = sphi 0, %s18
      %p15 = scmp.ge.s32.totalorder %s14, 8
      %s21 = sphi 0, %s33
      %s22 = sphi 0, %s29
      %s23 = sphi 0, %s21
      %s24 = sphi 0, %s22
      %s25 = sphi 0, %s23
      %s26 = sphi 0, %s24
      %s38 = sphi 0, %s40
      %s41 = sphi 0, %s38
      %s42 = sphi 0, %s41
      %s58 = sphi 0, %s42
      %s62 = sphi 0, %s62
      %s64 = sphi 0, %s62
      %s65 = sphi 0, %s64
      %s79 = sphi 0, %s65
      %s87 = sphi 0, %s89
      %s90 = sphi 0, %s87
      %s91 = sphi 0, %s90
      %s107 = sphi 0, %s91
    $region4: #{tpu_custom_call.1} parent=1 // loop_header_branch
      %17 = sbr.rel (%p15) target = $region8
    $region5: #{tpu_custom_call.1} parent=1 // loop_body
      %s19 = ssub.s32 %s14, 1
      %s20 = ssub.s32 %s14, 2
      %s27 = sadd.s32 1, %s22
      %p28 = scmp.ge.s32.totalorder %s27, 3
      %s29 = scalar_select %p28, 0, %s27
      %s30 = sadd.s32 1, %s21
      %s31 = scalar_select %p28, %s30, %s21
      %p32 = scmp.ge.s32.totalorder %s31, 2
      %s33 = scalar_select %p32, 0, %s31
      %s34 = ssub.s32 %s21, %s33
      %s35 = ssub.s32 %s22, %s29
      %s36 = sor.u32 %s34, %s35
      %p37 = scmp.eq.s32.totalorder %s36, 0
      %s39 = sadd.s32 %s38, 1
      %s40 = scalar_select %p37, %s38, %s39
      %p43 = pneg %p37
      %p44 = scmp.eq.s32.totalorder %s14, 5
      %p45 = por %p43, %p44
      %p46 = scmp.ne.s32.totalorder %s38, %s41
      %p47 = scmp.eq.s32.totalorder %s14, 0
      %p48 = por %p46, %p47
      %p49 = scmp.ne.s32.totalorder %s38, %s41
      %p50 = scmp.eq.s32.totalorder %s19, 5
      %p51 = por %p49, %p50
      %p52 = scmp.ne.s32.totalorder %s41, %s42
      %p53 = scmp.eq.s32.totalorder %s19, 0
      %p54 = por %p52, %p53
      %p55 = scmp.ne.s32.totalorder %s41, %s42
      %p56 = scmp.eq.s32.totalorder %s20, 5
      %p57 = por %p55, %p56
      %p59 = scmp.ne.s32.totalorder %s42, %s58
      %p60 = scmp.eq.s32.totalorder %s20, 0
      %p61 = por %p59, %p60
      %s63 = sadd.s32 %s62, 1
      %p66 = scmp.eq.s32.totalorder %s14, 5
      %p67 = scmp.ne.s32.totalorder %s62, %s64
      %p68 = scmp.eq.s32.totalorder %s14, 0
      %p69 = por %p67, %p68
      %p70 = scmp.ne.s32.totalorder %s62, %s64
      %p71 = scmp.eq.s32.totalorder %s19, 5
      %p72 = por %p70, %p71
      %p73 = scmp.ne.s32.totalorder %s64, %s65
      %p74 = scmp.eq.s32.totalorder %s19, 0
      %p75 = por %p73, %p74
      %p76 = scmp.ne.s32.totalorder %s64, %s65
      %p77 = scmp.eq.s32.totalorder %s20, 5
      %p78 = por %p76, %p77
      %p80 = scmp.ne.s32.totalorder %s65, %s79
      %p81 = scmp.eq.s32.totalorder %s20, 0
      %p82 = por %p80, %p81
      %s83 = ssub.s32 %s21, %s33
      %s84 = ssub.s32 %s22, %s29
      %s85 = sor.u32 %s83, %s84
      %p86 = scmp.eq.s32.totalorder %s85, 0
      %s88 = sadd.s32 %s87, 1
      %s89 = scalar_select %p86, %s87, %s88
      %p92 = pneg %p86
      %p93 = scmp.eq.s32.totalorder %s14, 5
      %p94 = por %p92, %p93
      %p95 = scmp.ne.s32.totalorder %s87, %s90
      %p96 = scmp.eq.s32.totalorder %s14, 0
      %p97 = por %p95, %p96
      %p98 = scmp.ne.s32.totalorder %s87, %s90
      %p99 = scmp.eq.s32.totalorder %s19, 5
      %p100 = por %p98, %p99
      %p101 = scmp.ne.s32.totalorder %s90, %s91
      %p102 = scmp.eq.s32.totalorder %s19, 0
      %p103 = por %p101, %p102
      %p104 = scmp.ne.s32.totalorder %s90, %s91
      %p105 = scmp.eq.s32.totalorder %s20, 5
      %p106 = por %p104, %p105
      %p108 = scmp.ne.s32.totalorder %s91, %s107
      %p109 = scmp.eq.s32.totalorder %s20, 0
      %p110 = por %p108, %p109
      %p111 = scmp.le.s32.totalorder 1, %s14
      %p112 = scmp.lt.s32.totalorder %s14, 7
      %p113 = pnand %p111, %p112
      %p114 = pneg %p113
      // Predicated region
      $region9: #{tpu_custom_call.1} parent=5 // pred_check
        _
      $region10: #{tpu_custom_call.1} parent=5 // pred_check_branch
        %116 = sbr.rel (%p113) target = $region12
      $region11: #{tpu_custom_call.1} parent=5 // pred_region
        %s117 = ssub.s32 %s14, 1
        // Predicated region
        $region13: #{tpu_custom_call.1} parent=11 // pred_check
          %p118 = pneg %p75
        $region14: #{tpu_custom_call.1} parent=11 // pred_check_branch
          %120 = sbr.rel (%p118) target = $region16
        $region15: #{tpu_custom_call.1} parent=11 // pred_region
          _
        $region16: #{tpu_custom_call.1} parent=11 // pred_fallthru
          _
      $region12: #{tpu_custom_call.1} parent=5 // pred_fallthru
        _
      %p121 = scmp.lt.s32.totalorder %s14, 6
      // Predicated region
      $region17: #{tpu_custom_call.1} parent=5 // pred_check
        %p122 = pneg %p121
      $region18: #{tpu_custom_call.1} parent=5 // pred_check_branch
        %124 = sbr.rel (%p122) target = $region20
      $region19: #{tpu_custom_call.1} parent=5 // pred_region
        // Predicated region
        $region21: #{tpu_custom_call.1} parent=19 // pred_check
          %p125 = pneg %p48
        $region22: #{tpu_custom_call.1} parent=19 // pred_check_branch
          %127 = sbr.rel (%p125) target = $region24
        $region23: #{tpu_custom_call.1} parent=19 // pred_region
          %s128 = sand.u32 %s38, 1
          %s129 = scalar_lea.sflag [#allocation4], %s128
          %s130 = sand.u32 %s38, 1
          %s131 = smul.addr %s130, 16
          %s132 = scalar_lea.vmem [#allocation3], %s131
          %s134 = ssub.s32 256, 256
          %135 = vsyncadd %s129, %s134
          %s136 = smul.addr %s21, 6
          %s137 = sadd.s32 %s22, %s136
          %s138 = smul.addr %s137, 128
          %s139 = scalar_lea.hbm %s0, %s138
          %s140 = sshll.u32 %s132, 4
          %s141 = int_to_ptr.vmem [resolvable:$true] %s140
          %146 = dma.hbm_to_vmem [thread:$0]  %s139, 256, %s141, %s129, 384, 128, 8
        $region24: #{tpu_custom_call.1} parent=19 // pred_fallthru
          _
      $region20: #{tpu_custom_call.1} parent=5 // pred_fallthru
        _
      %p147 = scmp.le.s32.totalorder 1, %s14
      %p148 = scmp.lt.s32.totalorder %s14, 7
      %p149 = pnand %p147, %p148
      %p150 = pneg %p149
      // Predicated region
      $region25: #{tpu_custom_call.1} parent=5 // pred_check
        _
      $region26: #{tpu_custom_call.1} parent=5 // pred_check_branch
        %152 = sbr.rel (%p149) target = $region28
      $region27: #{tpu_custom_call.1} parent=5 // pred_region
        %s153 = ssub.s32 %s14, 1
        %s154 = sand.u32 %s41, 1
        %s155 = scalar_lea.sflag [#allocation4], %s154
        %s156 = sand.u32 %s41, 1
        %s157 = smul.addr %s156, 16
        %s158 = scalar_lea.vmem [#allocation3], %s157
        // Predicated region
        $region29: #{tpu_custom_call.1} parent=27 // pred_check
          %p159 = pneg %p54
        $region30: #{tpu_custom_call.1} parent=27 // pred_check_branch
          %161 = sbr.rel (%p159) target = $region32
        $region31: #{tpu_custom_call.1} parent=27 // pred_region
          %162 = dma.done %s155, 256
        $region32: #{tpu_custom_call.1} parent=27 // pred_fallthru
          _
        %s163 = sand.u32 %s41, 1
        %s164 = scalar_lea.sflag [#allocation4], %s163
        %s165 = sand.u32 %s41, 1
        %s166 = smul.addr %s165, 16
        %s167 = scalar_lea.vmem [#allocation3], %s166
        %p168 = pneg %p54
        %p169 = pneg %p51
        %p170 = pneg %p75
        %p171 = pneg %p72
        %p172 = pneg %p103
        %p173 = pneg %p100
        %s174 = sand.u32 %s90, 1
        %s175 = scalar_lea.sflag [#allocation5], %s174
        %s176 = sand.u32 %s90, 1
        %s177 = smul.addr %s176, 16
        %s178 = scalar_lea.vmem [#allocation6], %s177
        %v179 = vld [vmem:[%s1] sm:$0xff]
        %v180 = vld [vmem:[%s1 + $0x8] sm:$0xff]
        %v181 = vld [vmem:[%s158] sm:$0xff]
        %v182 = vld [vmem:[%s158 + $0x8] sm:$0xff]
        %p183 = scmp.eq.s32.totalorder %s24, 0
        // Predicated region
        $region33: #{tpu_custom_call.1} parent=27 // pred_check
          %p184 = pneg %p183
        $region34: #{tpu_custom_call.1} parent=27 // pred_check_branch
          %186 = sbr.rel (%p184) target = $region36
        $region35: #{tpu_custom_call.1} parent=27 // pred_region
          %vm187 = vcmask 7168
          %188 = vst.msk [vmem:[#allocation2] sm:$0xff] %vm187, %v181
          %189 = vst.msk [vmem:[#allocation2 + $0x8] sm:$0xff] %vm187, %v182
        $region36: #{tpu_custom_call.1} parent=27 // pred_fallthru
          _
        %191 = vset.pattern.permute.xlu0 0
        %192 = vperm.xlu0 %191, %v179
        %v193 = vpop.permute.xlu0 %192
        %196 = vset.pattern.permute.xlu0 0
        %197 = vperm.xlu0 %196, %v180
        %v198 = vpop.permute.xlu0 %197
        %200 = vset.pattern.permute.xlu0 1
        %201 = vperm.xlu0 %200, %v179
        %v202 = vpop.permute.xlu0 %201
        %204 = vset.pattern.permute.xlu0 1
        %205 = vperm.xlu0 %204, %v180
        %v206 = vpop.permute.xlu0 %205
        %v208 = vmul.f32 %v202, %v181
        %v209 = vmul.f32 %v206, %v182
        %v210 = vlaneseq
        %v211 = vand.u32 %v210, 127
        %vm212 = vcmp.ge.s32.totalorder %v211, 1
        %213 = vrot.lane.b32.xlu0 %v193, 1
        %v214 = vpop.permute.xlu0 %213
        %215 = vrot.lane.b32.xlu0 %v198, 1
        %v216 = vpop.permute.xlu0 %215
        %v217 = vsel %vm212, %v214, 1.0
        %v218 = vsel %vm212, %v216, 1.0
        %219 = vrot.lane.b32.xlu0 %v208, 1
        %v220 = vpop.permute.xlu0 %219
        %221 = vrot.lane.b32.xlu0 %v209, 1
        %v222 = vpop.permute.xlu0 %221
        %v223 = vsel %vm212, %v220, 0.0
        %v224 = vsel %vm212, %v222, 0.0
        %v225 = vmul.f32 %v193, %v223
        %v226 = vmul.f32 %v198, %v224
        %v227 = vadd.f32 %v225, %v208
        %v228 = vadd.f32 %v226, %v209
        %v229 = vmul.f32 %v193, %v217
        %v230 = vmul.f32 %v198, %v218
        %vm231 = vcmp.ge.s32.totalorder %v211, 2
        %232 = vrot.lane.b32.xlu0 %v229, 2
        %v233 = vpop.permute.xlu0 %232
        %234 = vrot.lane.b32.xlu0 %v230, 2
        %v235 = vpop.permute.xlu0 %234
        %v236 = vsel %vm231, %v233, 1.0
        %v237 = vsel %vm231, %v235, 1.0
        %238 = vrot.lane.b32.xlu0 %v227, 2
        %v239 = vpop.permute.xlu0 %238
        %240 = vrot.lane.b32.xlu0 %v228, 2
        %v241 = vpop.permute.xlu0 %240
        %v242 = vsel %vm231, %v239, 0.0
        %v243 = vsel %vm231, %v241, 0.0
        %v244 = vmul.f32 %v229, %v242
        %v245 = vmul.f32 %v230, %v243
        %v246 = vadd.f32 %v244, %v227
        %v247 = vadd.f32 %v245, %v228
        %v248 = vmul.f32 %v229, %v236
        %v249 = vmul.f32 %v230, %v237
        %vm250 = vcmp.ge.s32.totalorder %v211, 4
        %251 = vrot.lane.b32.xlu0 %v248, 4
        %v252 = vpop.permute.xlu0 %251
        %253 = vrot.lane.b32.xlu0 %v249, 4
        %v254 = vpop.permute.xlu0 %253
        %v255 = vsel %vm250, %v252, 1.0
        %v256 = vsel %vm250, %v254, 1.0
        %257 = vrot.lane.b32.xlu0 %v246, 4
        %v258 = vpop.permute.xlu0 %257
        %259 = vrot.lane.b32.xlu0 %v247, 4
        %v260 = vpop.permute.xlu0 %259
        %v261 = vsel %vm250, %v258, 0.0
        %v262 = vsel %vm250, %v260, 0.0
        %v263 = vmul.f32 %v248, %v261
        %v264 = vmul.f32 %v249, %v262
        %v265 = vadd.f32 %v263, %v246
        %v266 = vadd.f32 %v264, %v247
        %v267 = vmul.f32 %v248, %v255
        %v268 = vmul.f32 %v249, %v256
        %vm269 = vcmp.ge.s32.totalorder %v211, 8
        %270 = vrot.lane.b32.xlu0 %v267, 8
        %v271 = vpop.permute.xlu0 %270
        %272 = vrot.lane.b32.xlu0 %v268, 8
        %v273 = vpop.permute.xlu0 %272
        %v274 = vsel %vm269, %v271, 1.0
        %v275 = vsel %vm269, %v273, 1.0
        %276 = vrot.lane.b32.xlu0 %v265, 8
        %v277 = vpop.permute.xlu0 %276
        %278 = vrot.lane.b32.xlu0 %v266, 8
        %v279 = vpop.permute.xlu0 %278
        %v280 = vsel %vm269, %v277, 0.0
        %v281 = vsel %vm269, %v279, 0.0
        %v282 = vmul.f32 %v267, %v280
        %v283 = vmul.f32 %v268, %v281
        %v284 = vadd.f32 %v282, %v265
        %v285 = vadd.f32 %v283, %v266
        %v286 = vmul.f32 %v267, %v274
        %v287 = vmul.f32 %v268, %v275
        %vm288 = vcmp.ge.s32.totalorder %v211, 16
        %289 = vrot.lane.b32.xlu0 %v286, 16
        %v290 = vpop.permute.xlu0 %289
        %291 = vrot.lane.b32.xlu0 %v287, 16
        %v292 = vpop.permute.xlu0 %291
        %v293 = vsel %vm288, %v290, 1.0
        %v294 = vsel %vm288, %v292, 1.0
        %295 = vrot.lane.b32.xlu0 %v284, 16
        %v296 = vpop.permute.xlu0 %295
        %297 = vrot.lane.b32.xlu0 %v285, 16
        %v298 = vpop.permute.xlu0 %297
        %v299 = vsel %vm288, %v296, 0.0
        %v300 = vsel %vm288, %v298, 0.0
        %v301 = vmul.f32 %v286, %v299
        %v302 = vmul.f32 %v287, %v300
        %v303 = vadd.f32 %v301, %v284
        %v304 = vadd.f32 %v302, %v285
        %v305 = vmul.f32 %v286, %v293
        %v306 = vmul.f32 %v287, %v294
        %vm307 = vcmp.ge.s32.totalorder %v211, 32
        %308 = vrot.lane.b32.xlu0 %v305, 32
        %v309 = vpop.permute.xlu0 %308
        %310 = vrot.lane.b32.xlu0 %v306, 32
        %v311 = vpop.permute.xlu0 %310
        %v312 = vsel %vm307, %v309, 1.0
        %v313 = vsel %vm307, %v311, 1.0
        %314 = vrot.lane.b32.xlu0 %v303, 32
        %v315 = vpop.permute.xlu0 %314
        %316 = vrot.lane.b32.xlu0 %v304, 32
        %v317 = vpop.permute.xlu0 %316
        %v318 = vsel %vm307, %v315, 0.0
        %v319 = vsel %vm307, %v317, 0.0
        %v320 = vmul.f32 %v305, %v318
        %v321 = vmul.f32 %v306, %v319
        %v322 = vadd.f32 %v320, %v303
        %v323 = vadd.f32 %v321, %v304
        %v324 = vmul.f32 %v305, %v312
        %v325 = vmul.f32 %v306, %v313
        %vm326 = vcmp.ge.s32.totalorder %v211, 64
        %327 = vrot.lane.b32.xlu0 %v324, 64
        %v328 = vpop.permute.xlu0 %327
        %329 = vrot.lane.b32.xlu0 %v325, 64
        %v330 = vpop.permute.xlu0 %329
        %v331 = vsel %vm326, %v328, 1.0
        %v332 = vsel %vm326, %v330, 1.0
        %333 = vrot.lane.b32.xlu0 %v322, 64
        %v334 = vpop.permute.xlu0 %333
        %335 = vrot.lane.b32.xlu0 %v323, 64
        %v336 = vpop.permute.xlu0 %335
        %v337 = vsel %vm326, %v334, 0.0
        %v338 = vsel %vm326, %v336, 0.0
        %v339 = vmul.f32 %v324, %v337
        %v340 = vmul.f32 %v325, %v338
        %v341 = vadd.f32 %v339, %v322
        %v342 = vadd.f32 %v340, %v323
        %v343 = vmul.f32 %v324, %v331
        %v344 = vmul.f32 %v325, %v332
        %v345 = vld [vmem:[#allocation2] sm:$0xff]
        %v346 = vld [vmem:[#allocation2 + $0x8] sm:$0xff]
        %348 = vset.pattern.permute.xlu0 0
        %349 = vperm.xlu0 %348, %v345
        %v350 = vpop.permute.xlu0 %349
        %353 = vset.pattern.permute.xlu0 0
        %354 = vperm.xlu0 %353, %v346
        %v355 = vpop.permute.xlu0 %354
        %v357 = vmul.f32 %v343, %v350
        %v358 = vmul.f32 %v344, %v355
        %v359 = vadd.f32 %v357, %v341
        %v360 = vadd.f32 %v358, %v342
        %363 = vrot.lane.b32.xlu0 %v359, 1
        %v364 = vpop.permute.xlu0 %363
        %365 = vrot.lane.b32.xlu0 %v360, 1
        %v366 = vpop.permute.xlu0 %365
        %vm369 = vcmask 7168
        %370 = vst.msk [vmem:[#allocation2] sm:$0xff] %vm369, %v364
        %371 = vst.msk [vmem:[#allocation2 + $0x8] sm:$0xff] %vm369, %v366
        %v372 = vmul.f32 %v359, 1000000.0
        %v373 = vmul.f32 %v360, 1000000.0
        %v374 = vadd.f32 %v372, 1.0
        %v375 = vlog2.pop %v374
        %v376 = vmul.f32 %v375, 0.6931472
        %v377 = vmul.f32 -0.5, %v372
        %v378 = vadd.f32 %v377, 1.0
        %v379 = vmul.f32 %v378, %v372
        %v380 = vand.u32 2147483647, %v372
        %vm381 = vcmp.lt.f32.partialorder %v380, 0.0004427343
        %v382 = vsel %vm381, %v379, %v376
        %v383 = vadd.f32 %v373, 1.0
        %v384 = vlog2.pop %v383
        %v385 = vmul.f32 %v384, 0.6931472
        %v386 = vmul.f32 -0.5, %v373
        %v387 = vadd.f32 %v386, 1.0
        %v388 = vmul.f32 %v387, %v373
        %v389 = vand.u32 2147483647, %v373
        %vm390 = vcmp.lt.f32.partialorder %v389, 0.0004427343
        %v391 = vsel %vm390, %v388, %v385
        %392 = vset.pattern.permute.xlu0 2
        %393 = vperm.xlu0 %392, %v179
        %v394 = vpop.permute.xlu0 %393
        %396 = vset.pattern.permute.xlu0 2
        %397 = vperm.xlu0 %396, %v180
        %v398 = vpop.permute.xlu0 %397
        %v400 = vmul.f32 %v394, %v382
        %v401 = vmul.f32 %v398, %v391
        %v402 = vmul.f32 %v400, 1.442695
        %v403 = vpow.pop %v402
        %v404 = vmul.f32 %v401, 1.442695
        %v405 = vpow.pop %v404
        %406 = vset.pattern.permute.xlu0 5
        %407 = vperm.xlu0 %406, %v179
        %v408 = vpop.permute.xlu0 %407
        %410 = vset.pattern.permute.xlu0 5
        %411 = vperm.xlu0 %410, %v180
        %v412 = vpop.permute.xlu0 %411
        %v414 = vmul.f32 %v408, %v403
        %v415 = vmul.f32 %v412, %v405
        %v416 = vmul.f32 %v181, %v414
        %v417 = vmul.f32 %v182, %v415
        %418 = vset.pattern.permute.xlu0 3
        %419 = vperm.xlu0 %418, %v179
        %v420 = vpop.permute.xlu0 %419
        %422 = vset.pattern.permute.xlu0 3
        %423 = vperm.xlu0 %422, %v180
        %v424 = vpop.permute.xlu0 %423
        %v426 = vadd.f32 %v416, %v420
        %v427 = vadd.f32 %v417, %v424
        %428 = vset.pattern.permute.xlu0 4
        %429 = vperm.xlu0 %428, %v179
        %v430 = vpop.permute.xlu0 %429
        %432 = vset.pattern.permute.xlu0 4
        %433 = vperm.xlu0 %432, %v180
        %v434 = vpop.permute.xlu0 %433
        %v436 = vpow.f32 %v426, %v430
        %v437 = vpow.f32 %v427, %v434
        %438 = vset.pattern.permute.xlu0 6
        %439 = vperm.xlu0 %438, %v179
        %v440 = vpop.permute.xlu0 %439
        %442 = vset.pattern.permute.xlu0 6
        %443 = vperm.xlu0 %442, %v180
        %v444 = vpop.permute.xlu0 %443
        %v446 = vsub.f32 %v436, %v440
        %v447 = vsub.f32 %v437, %v444
        %448 = vst [vmem:[%s178] sm:$0xff] %v446
        %449 = vst [vmem:[%s178 + $0x8] sm:$0xff] %v447
        %s450 = sand.u32 %s90, 1
        %s451 = scalar_lea.sflag [#allocation5], %s450
        %s452 = sand.u32 %s90, 1
        %s453 = smul.addr %s452, 16
        %s454 = scalar_lea.vmem [#allocation6], %s453
        // Predicated region
        $region37: #{tpu_custom_call.1} parent=27 // pred_check
          %p455 = pneg %p100
        $region38: #{tpu_custom_call.1} parent=27 // pred_check_branch
          %457 = sbr.rel (%p455) target = $region40
        $region39: #{tpu_custom_call.1} parent=27 // pred_region
          %s459 = ssub.s32 256, 256
          %460 = vsyncadd %s451, %s459
          %s461 = smul.addr %s23, 6
          %s462 = sadd.s32 %s24, %s461
          %s463 = smul.addr %s462, 128
          %s464 = scalar_lea.hbm %s2, %s463
          %s465 = sshll.u32 %s454, 4
          %s466 = int_to_ptr.vmem [resolvable:$true] %s465
          %471 = dma.vmem_to_hbm [thread:$0]  %s466, 256, %s464, %s451, 128, 384, 8
        $region40: #{tpu_custom_call.1} parent=27 // pred_fallthru
          _
      $region28: #{tpu_custom_call.1} parent=5 // pred_fallthru
        _
      %p472 = scmp.le.s32.totalorder 2, %s14
      // Predicated region
      $region41: #{tpu_custom_call.1} parent=5 // pred_check
        %p473 = pneg %p472
      $region42: #{tpu_custom_call.1} parent=5 // pred_check_branch
        %475 = sbr.rel (%p473) target = $region44
      $region43: #{tpu_custom_call.1} parent=5 // pred_region
        %s476 = ssub.s32 %s14, 2
        // Predicated region
        $region45: #{tpu_custom_call.1} parent=43 // pred_check
          %p477 = pneg %p106
        $region46: #{tpu_custom_call.1} parent=43 // pred_check_branch
          %479 = sbr.rel (%p477) target = $region48
        $region47: #{tpu_custom_call.1} parent=43 // pred_region
          %s480 = sand.u32 %s91, 1
          %s481 = scalar_lea.sflag [#allocation5], %s480
          %s482 = sand.u32 %s91, 1
          %s483 = smul.addr %s482, 16
          %s484 = scalar_lea.vmem [#allocation6], %s483
          %485 = dma.done %s481, 256
        $region48: #{tpu_custom_call.1} parent=43 // pred_fallthru
          _
      $region44: #{tpu_custom_call.1} parent=5 // pred_fallthru
        _
    $region6: #{tpu_custom_call.1} parent=1 // loop_footer
      %s18 = sadd.s32 1, %s14
    $region7: #{tpu_custom_call.1} parent=1 // loop_footer_branch
      %13 = sbr.rel target = $region3
    $region8: #{tpu_custom_call.1} parent=1 // loop_exit
      _
    %486 = vsyncpa [#allocation4], 1
    %s487 = scalar_lea.sflag [#allocation4], 1
    %488 = vsyncpa %s487, 1
    %489 = vsyncpa [#allocation5], 1
    %s490 = scalar_lea.sflag [#allocation5], 1
    %491 = vsyncpa %s490, 1

</llo_original>
